<compile_context>
chip_gen: v7x
topology: tpu7x:2x2x1
jax: 0.10.0
libtpu: 0.0.40
codegen_flags: <defaults>
</compile_context>

<pallas_src>
import functools

import jax
import jax.numpy as jnp
from jax.experimental import pallas as pl
from jax.experimental.pallas import tpu as pltpu

_BN_EPS = 1e-5


def _block_kernel(x_ref, w_ref, b_ref, m_ref, o_ref, *, H, W, num_layers):
    """Fused Block forward for one batch element.

    x_ref : (1, C, S)     layer-0 input, NCHW flattened over space (S = H*W)
    w_ref : (L, C, 9*C)   folded weights, w[l, co, k*C + ci], k = dy*3 + dx
    b_ref : (L, C, 1)     folded per-channel bias
    m_ref : (9, S)        precomputed pad=1 border masks (one per tap)
    o_ref : (1, C, S)     block output
    """
    S = H * W
    act = x_ref[0]            # (C, S) f32 -- lives in vregs across layers
    masks = m_ref[...]        # (9, S)   -- loaded once, reused by every layer

    for l in range(num_layers):                      # static layer loop
        w = w_ref[l]                                 # (C, 9C)
        bias = b_ref[l]                              # (C, 1)

        slabs = []
        for k in range(9):
            dy, dx = k // 3, k % 3
            off = (dy - 1) * W + (dx - 1)            # flattened spatial shift
            if off == 0:
                shifted = act
            else:
                # shifted[:, s] == act[:, (s + off) % S]; wrapped lanes are
                # exactly the ones zeroed by the precomputed border mask.
                shifted = pltpu.roll(act, shift=(-off) % S, axis=1)
            slabs.append(shifted * masks[k:k + 1, :])

        stacked = jnp.concatenate(slabs, axis=0)     # (9C, S)
        y = jnp.dot(w, stacked,
                    preferred_element_type=jnp.float32)   # MXU: (C,9C)@(9C,S)
        act = jnp.maximum(y + bias, 0.0)             # folded BN bias + ReLU

    o_ref[0] = act.astype(o_ref.dtype)


def _make_border_masks(H, W):
    """(9, H*W) {0,1} f32 masks: mask[k, s] = 1 iff tap k at position s is in-bounds."""
    S = H * W
    pos = jnp.arange(S, dtype=jnp.int32)
    row = pos // W
    col = pos % W
    masks = []
    for k in range(9):
        oy, ox = k // 3 - 1, k % 3 - 1
        valid = jnp.ones((S,), jnp.bool_)
        if oy < 0:
            valid = valid & (row >= 1)
        if oy > 0:
            valid = valid & (row <= H - 2)
        if ox < 0:
            valid = valid & (col >= 1)
        if ox > 0:
            valid = valid & (col <= W - 2)
        masks.append(valid.astype(jnp.float32))
    return jnp.stack(masks)                          # (9, S)


@functools.partial(jax.jit, static_argnums=(3,))
def block_forward(x_nchw, w_all, b_all, out_c):
    """Block.forward.  x_nchw: (N, Cin, H, W) f32 -> (N, out_c, H, W) f32."""
    N, in_c, H, W = x_nchw.shape
    L, C, _ = w_all.shape
    S = H * W

    x = x_nchw.reshape(N, in_c, S)                   # NCHW -> (N, C, H*W): pure reshape
    if in_c < C:                                     # channel-pad so all layers share C
        x = jnp.pad(x, ((0, 0), (0, C - in_c), (0, 0)))

    masks = _make_border_masks(H, W)

    kernel = functools.partial(_block_kernel, H=H, W=W, num_layers=L)
    out = pl.pallas_call(
        kernel,
        out_shape=jax.ShapeDtypeStruct((N, C, S), jnp.float32),
        grid_spec=pltpu.PrefetchScalarGridSpec(
            num_scalar_prefetch=0,
            grid=(N,),                               # batch only; layers fused in-body
            in_specs=[
                pl.BlockSpec((1, C, S), lambda n: (n, 0, 0)),       # per-batch input
                pl.BlockSpec((L, C, 9 * C), lambda n: (0, 0, 0)),   # all layer weights
                pl.BlockSpec((L, C, 1), lambda n: (0, 0, 0)),       # all layer biases
                pl.BlockSpec((9, S), lambda n: (0, 0)),             # border masks
            ],
            out_specs=pl.BlockSpec((1, C, S), lambda n: (n, 0, 0)),
        ),
        compiler_params=pltpu.CompilerParams(
            dimension_semantics=("parallel",)),      # >=2-extent parallel axis (v7x)
    )(x, w_all, b_all, masks)

    if out_c < C:                                    # no-op slice when out_c == C
        out = out[:, :out_c, :]
    return out.reshape(N, out_c, H, W)


def make_raw_layer_params(key, in_c, out_c):
    """Deterministic synthetic parameters for one Conv2d + BatchNorm2d layer."""
    k_w, k_b, k_g, k_be, k_m, k_v = jax.random.split(key, 6)
    w = jax.random.normal(k_w, (out_c, in_c, 3, 3), jnp.float32) * 0.1   # OIHW
    b = jax.random.normal(k_b, (out_c,), jnp.float32) * 0.1
    gamma = 1.0 + 0.1 * jax.random.normal(k_g, (out_c,), jnp.float32)
    beta = 0.1 * jax.random.normal(k_be, (out_c,), jnp.float32)
    mean = 0.1 * jax.random.normal(k_m, (out_c,), jnp.float32)
    var = 1.0 + 0.1 * jax.random.uniform(k_v, (out_c,), jnp.float32)
    return (w, b, gamma, beta, mean, var)


def fold_block_params(layers):
    """Fold eval-mode BN (+ conv bias) into per-layer (C, 9*C) weights / (C, 1) bias."""
    C = max(max(w.shape[0], w.shape[1]) for (w, *_rest) in layers)
    ws, bs = [], []
    for (w, b, gamma, beta, mean, var) in layers:
        out_c, in_c = w.shape[0], w.shape[1]
        scale = gamma / jnp.sqrt(var + _BN_EPS)
        w_f = w * scale[:, None, None, None]              # fold BN scale into weights
        b_f = beta + (b - mean) * scale                   # fold conv bias + BN shift
        w_t = jnp.transpose(w_f, (0, 2, 3, 1))            # (out_c, 3, 3, in_c)
        w_t = jnp.pad(w_t, ((0, C - out_c), (0, 0), (0, 0), (0, C - in_c)))
        ws.append(w_t.reshape(C, 9 * C))                  # w[co, (dy*3+dx)*C + ci]
        bs.append(jnp.pad(b_f, (0, C - out_c)).reshape(C, 1))
    return jnp.stack(ws), jnp.stack(bs)


def reference_block(x, layers):
    """Pure-JAX reference: Conv2d(3x3, pad=1) -> BatchNorm2d(eval) -> ReLU, repeated."""
    for (w, b, gamma, beta, mean, var) in layers:
        y = jax.lax.conv_general_dilated(
            x, w, window_strides=(1, 1), padding=((1, 1), (1, 1)),
            dimension_numbers=("NCHW", "OIHW", "NCHW"),
            precision=jax.lax.Precision.HIGHEST)
        y = y + b[None, :, None, None]
        y = (y - mean[None, :, None, None]) / jnp.sqrt(var[None, :, None, None] + _BN_EPS)
        y = y * gamma[None, :, None, None] + beta[None, :, None, None]
        x = jnp.maximum(y, 0.0)
    return x


if __name__ == "__main__":
    # Block(in_c=4, out_c=4, dropout=0, repeat=2): channels equal so the repeated
    # conv(in_c, out_c) layers are shape-consistent (as the PyTorch module requires).
    N, C_IN, C_OUT, H, W = 2, 4, 4, 16, 16
    REPEAT = 2

    root = jax.random.PRNGKey(0)
    kx, *layer_keys = jax.random.split(root, 1 + REPEAT)
    x = jax.random.normal(kx, (N, C_IN, H, W), jnp.float32)

    raw_layers = []
    in_c = C_IN
    for lk in layer_keys:
        raw_layers.append(make_raw_layer_params(lk, in_c, C_OUT))
        in_c = C_OUT

    w_all, b_all = fold_block_params(raw_layers)

    out = block_forward(x, w_all, b_all, C_OUT)
    jax.block_until_ready(out)

    assert out.shape == (N, C_OUT, H, W), out.shape
    assert out.dtype == jnp.float32

    # Numerical self-check against a pure-JAX reference of the same module.
    ref = reference_block(x, raw_layers)
    max_err = float(jnp.max(jnp.abs(out - ref)))
    assert max_err < 2e-4, f"max abs error vs reference: {max_err}"
    print("KERNEL_OK")
</pallas_src>

<mosaic_0001>
module attributes {stable_mosaic.version = 11 : i64} {
  func.func @_block_kernel(%arg0: i32, %arg1: memref<1x4x256xf32, #tpu.memory_space<vmem>>, %arg2: memref<2x4x36xf32, #tpu.memory_space<vmem>>, %arg3: memref<2x4x1xf32, #tpu.memory_space<vmem>>, %arg4: memref<9x256xf32, #tpu.memory_space<vmem>>, %arg5: memref<1x4x256xf32, #tpu.memory_space<vmem>>) attributes {dimension_semantics = [#tpu.dimension_semantics<parallel>], iteration_bounds = array<i64: 2>, scalar_prefetch = 0 : i64, scratch_operands = 0 : i64, tpu.core_type = #tpu.core_type<tc>, window_params = [{transform_indices = @transform_0, window_bounds = array<i64: 1, 4, 256>}, {pipeline_mode = #tpu.pipeline_mode<synchronous>, transform_indices = @transform_1, window_bounds = array<i64: 2, 4, 36>}, {pipeline_mode = #tpu.pipeline_mode<synchronous>, transform_indices = @transform_2, window_bounds = array<i64: 2, 4, 1>}, {pipeline_mode = #tpu.pipeline_mode<synchronous>, transform_indices = @transform_3, window_bounds = array<i64: 9, 256>}, {transform_indices = @transform_4, window_bounds = array<i64: 1, 4, 256>}]} {
    %c0 = arith.constant 0 : index
    %c0_0 = arith.constant 0 : index
    %c0_1 = arith.constant 0 : index
    %0 = vector.load %arg1[%c0, %c0_0, %c0_1] : memref<1x4x256xf32, #tpu.memory_space<vmem>>, vector<1x4x256xf32>
    %1 = vector.shape_cast %0 : vector<1x4x256xf32> to vector<4x256xf32>
    %c0_2 = arith.constant 0 : index
    %c0_3 = arith.constant 0 : index
    %2 = vector.load %arg4[%c0_2, %c0_3] : memref<9x256xf32, #tpu.memory_space<vmem>>, vector<9x256xf32>
    %c0_4 = arith.constant 0 : index
    %c0_5 = arith.constant 0 : index
    %c0_6 = arith.constant 0 : index
    %3 = vector.load %arg2[%c0_4, %c0_5, %c0_6] : memref<2x4x36xf32, #tpu.memory_space<vmem>>, vector<1x4x36xf32>
    %4 = vector.shape_cast %3 : vector<1x4x36xf32> to vector<4x36xf32>
    %c0_7 = arith.constant 0 : index
    %c0_8 = arith.constant 0 : index
    %c0_9 = arith.constant 0 : index
    %5 = vector.load %arg3[%c0_7, %c0_8, %c0_9] : memref<2x4x1xf32, #tpu.memory_space<vmem>>, vector<1x4x1xf32>
    %6 = vector.shape_cast %5 : vector<1x4x1xf32> to vector<4x1xf32>
    %c17_i32 = arith.constant 17 : i32
    %7 = tpu.dynamic_rotate %1 by %c17_i32 dim 1 : vector<4x256xf32>, i32 -> vector<4x256xf32>
    %8 = vector.extract_strided_slice %2 {offsets = [0, 0], sizes = [1, 256], strides = [1, 1]} : vector<9x256xf32> to vector<1x256xf32>
    %9 = vector.broadcast %8 : vector<1x256xf32> to vector<4x256xf32>
    %10 = arith.mulf %7, %9 : vector<4x256xf32>
    %c16_i32 = arith.constant 16 : i32
    %11 = tpu.dynamic_rotate %1 by %c16_i32 dim 1 : vector<4x256xf32>, i32 -> vector<4x256xf32>
    %12 = vector.extract_strided_slice %2 {offsets = [1, 0], sizes = [1, 256], strides = [1, 1]} : vector<9x256xf32> to vector<1x256xf32>
    %13 = vector.broadcast %12 : vector<1x256xf32> to vector<4x256xf32>
    %14 = arith.mulf %11, %13 : vector<4x256xf32>
    %c15_i32 = arith.constant 15 : i32
    %15 = tpu.dynamic_rotate %1 by %c15_i32 dim 1 : vector<4x256xf32>, i32 -> vector<4x256xf32>
    %16 = vector.extract_strided_slice %2 {offsets = [2, 0], sizes = [1, 256], strides = [1, 1]} : vector<9x256xf32> to vector<1x256xf32>
    %17 = vector.broadcast %16 : vector<1x256xf32> to vector<4x256xf32>
    %18 = arith.mulf %15, %17 : vector<4x256xf32>
    %c1_i32 = arith.constant 1 : i32
    %19 = tpu.dynamic_rotate %1 by %c1_i32 dim 1 : vector<4x256xf32>, i32 -> vector<4x256xf32>
    %20 = vector.extract_strided_slice %2 {offsets = [3, 0], sizes = [1, 256], strides = [1, 1]} : vector<9x256xf32> to vector<1x256xf32>
    %21 = vector.broadcast %20 : vector<1x256xf32> to vector<4x256xf32>
    %22 = arith.mulf %19, %21 : vector<4x256xf32>
    %23 = vector.extract_strided_slice %2 {offsets = [4, 0], sizes = [1, 256], strides = [1, 1]} : vector<9x256xf32> to vector<1x256xf32>
    %24 = vector.broadcast %23 : vector<1x256xf32> to vector<4x256xf32>
    %25 = arith.mulf %1, %24 : vector<4x256xf32>
    %c255_i32 = arith.constant 255 : i32
    %26 = tpu.dynamic_rotate %1 by %c255_i32 dim 1 : vector<4x256xf32>, i32 -> vector<4x256xf32>
    %27 = vector.extract_strided_slice %2 {offsets = [5, 0], sizes = [1, 256], strides = [1, 1]} : vector<9x256xf32> to vector<1x256xf32>
    %28 = vector.broadcast %27 : vector<1x256xf32> to vector<4x256xf32>
    %29 = arith.mulf %26, %28 : vector<4x256xf32>
    %c241_i32 = arith.constant 241 : i32
    %30 = tpu.dynamic_rotate %1 by %c241_i32 dim 1 : vector<4x256xf32>, i32 -> vector<4x256xf32>
    %31 = vector.extract_strided_slice %2 {offsets = [6, 0], sizes = [1, 256], strides = [1, 1]} : vector<9x256xf32> to vector<1x256xf32>
    %32 = vector.broadcast %31 : vector<1x256xf32> to vector<4x256xf32>
    %33 = arith.mulf %30, %32 : vector<4x256xf32>
    %c240_i32 = arith.constant 240 : i32
    %34 = tpu.dynamic_rotate %1 by %c240_i32 dim 1 : vector<4x256xf32>, i32 -> vector<4x256xf32>
    %35 = vector.extract_strided_slice %2 {offsets = [7, 0], sizes = [1, 256], strides = [1, 1]} : vector<9x256xf32> to vector<1x256xf32>
    %36 = vector.broadcast %35 : vector<1x256xf32> to vector<4x256xf32>
    %37 = arith.mulf %34, %36 : vector<4x256xf32>
    %c239_i32 = arith.constant 239 : i32
    %38 = tpu.dynamic_rotate %1 by %c239_i32 dim 1 : vector<4x256xf32>, i32 -> vector<4x256xf32>
    %39 = vector.extract_strided_slice %2 {offsets = [8, 0], sizes = [1, 256], strides = [1, 1]} : vector<9x256xf32> to vector<1x256xf32>
    %40 = vector.broadcast %39 : vector<1x256xf32> to vector<4x256xf32>
    %41 = arith.mulf %38, %40 : vector<4x256xf32>
    %42 = tpu.concatenate %10, %14, %18, %22, %25, %29, %33, %37, %41 in 0 : vector<4x256xf32>, vector<4x256xf32>, vector<4x256xf32>, vector<4x256xf32>, vector<4x256xf32>, vector<4x256xf32>, vector<4x256xf32>, vector<4x256xf32>, vector<4x256xf32> -> vector<36x256xf32>
    %cst = arith.constant dense<0.000000e+00> : vector<4x256xf32>
    %43 = tpu.matmul %4, %42, %cst {dimension_numbers = #tpu.dot_dimension_numbers<[1], [0], [0], [1], [0, 0, 1, 1], [], []>} : vector<4x36xf32>, vector<36x256xf32>, vector<4x256xf32> -> vector<4x256xf32>
    %44 = vector.broadcast %6 : vector<4x1xf32> to vector<4x256xf32>
    %45 = arith.addf %43, %44 : vector<4x256xf32>
    %cst_10 = arith.constant 0.000000e+00 : f32
    %46 = vector.broadcast %cst_10 : f32 to vector<4x256xf32>
    %47 = arith.maximumf %45, %46 : vector<4x256xf32>
    %c1 = arith.constant 1 : index
    %c0_11 = arith.constant 0 : index
    %c0_12 = arith.constant 0 : index
    %48 = vector.load %arg2[%c1, %c0_11, %c0_12] : memref<2x4x36xf32, #tpu.memory_space<vmem>>, vector<1x4x36xf32>
    %49 = vector.shape_cast %48 : vector<1x4x36xf32> to vector<4x36xf32>
    %c1_13 = arith.constant 1 : index
    %c0_14 = arith.constant 0 : index
    %c0_15 = arith.constant 0 : index
    %50 = vector.load %arg3[%c1_13, %c0_14, %c0_15] : memref<2x4x1xf32, #tpu.memory_space<vmem>>, vector<1x4x1xf32>
    %51 = vector.shape_cast %50 : vector<1x4x1xf32> to vector<4x1xf32>
    %c17_i32_16 = arith.constant 17 : i32
    %52 = tpu.dynamic_rotate %47 by %c17_i32_16 dim 1 : vector<4x256xf32>, i32 -> vector<4x256xf32>
    %53 = vector.extract_strided_slice %2 {offsets = [0, 0], sizes = [1, 256], strides = [1, 1]} : vector<9x256xf32> to vector<1x256xf32>
    %54 = vector.broadcast %53 : vector<1x256xf32> to vector<4x256xf32>
    %55 = arith.mulf %52, %54 : vector<4x256xf32>
    %c16_i32_17 = arith.constant 16 : i32
    %56 = tpu.dynamic_rotate %47 by %c16_i32_17 dim 1 : vector<4x256xf32>, i32 -> vector<4x256xf32>
    %57 = vector.extract_strided_slice %2 {offsets = [1, 0], sizes = [1, 256], strides = [1, 1]} : vector<9x256xf32> to vector<1x256xf32>
    %58 = vector.broadcast %57 : vector<1x256xf32> to vector<4x256xf32>
    %59 = arith.mulf %56, %58 : vector<4x256xf32>
    %c15_i32_18 = arith.constant 15 : i32
    %60 = tpu.dynamic_rotate %47 by %c15_i32_18 dim 1 : vector<4x256xf32>, i32 -> vector<4x256xf32>
    %61 = vector.extract_strided_slice %2 {offsets = [2, 0], sizes = [1, 256], strides = [1, 1]} : vector<9x256xf32> to vector<1x256xf32>
    %62 = vector.broadcast %61 : vector<1x256xf32> to vector<4x256xf32>
    %63 = arith.mulf %60, %62 : vector<4x256xf32>
    %c1_i32_19 = arith.constant 1 : i32
    %64 = tpu.dynamic_rotate %47 by %c1_i32_19 dim 1 : vector<4x256xf32>, i32 -> vector<4x256xf32>
    %65 = vector.extract_strided_slice %2 {offsets = [3, 0], sizes = [1, 256], strides = [1, 1]} : vector<9x256xf32> to vector<1x256xf32>
    %66 = vector.broadcast %65 : vector<1x256xf32> to vector<4x256xf32>
    %67 = arith.mulf %64, %66 : vector<4x256xf32>
    %68 = vector.extract_strided_slice %2 {offsets = [4, 0], sizes = [1, 256], strides = [1, 1]} : vector<9x256xf32> to vector<1x256xf32>
    %69 = vector.broadcast %68 : vector<1x256xf32> to vector<4x256xf32>
    %70 = arith.mulf %47, %69 : vector<4x256xf32>
    %c255_i32_20 = arith.constant 255 : i32
    %71 = tpu.dynamic_rotate %47 by %c255_i32_20 dim 1 : vector<4x256xf32>, i32 -> vector<4x256xf32>
    %72 = vector.extract_strided_slice %2 {offsets = [5, 0], sizes = [1, 256], strides = [1, 1]} : vector<9x256xf32> to vector<1x256xf32>
    %73 = vector.broadcast %72 : vector<1x256xf32> to vector<4x256xf32>
    %74 = arith.mulf %71, %73 : vector<4x256xf32>
    %c241_i32_21 = arith.constant 241 : i32
    %75 = tpu.dynamic_rotate %47 by %c241_i32_21 dim 1 : vector<4x256xf32>, i32 -> vector<4x256xf32>
    %76 = vector.extract_strided_slice %2 {offsets = [6, 0], sizes = [1, 256], strides = [1, 1]} : vector<9x256xf32> to vector<1x256xf32>
    %77 = vector.broadcast %76 : vector<1x256xf32> to vector<4x256xf32>
    %78 = arith.mulf %75, %77 : vector<4x256xf32>
    %c240_i32_22 = arith.constant 240 : i32
    %79 = tpu.dynamic_rotate %47 by %c240_i32_22 dim 1 : vector<4x256xf32>, i32 -> vector<4x256xf32>
    %80 = vector.extract_strided_slice %2 {offsets = [7, 0], sizes = [1, 256], strides = [1, 1]} : vector<9x256xf32> to vector<1x256xf32>
    %81 = vector.broadcast %80 : vector<1x256xf32> to vector<4x256xf32>
    %82 = arith.mulf %79, %81 : vector<4x256xf32>
    %c239_i32_23 = arith.constant 239 : i32
    %83 = tpu.dynamic_rotate %47 by %c239_i32_23 dim 1 : vector<4x256xf32>, i32 -> vector<4x256xf32>
    %84 = vector.extract_strided_slice %2 {offsets = [8, 0], sizes = [1, 256], strides = [1, 1]} : vector<9x256xf32> to vector<1x256xf32>
    %85 = vector.broadcast %84 : vector<1x256xf32> to vector<4x256xf32>
    %86 = arith.mulf %83, %85 : vector<4x256xf32>
    %87 = tpu.concatenate %55, %59, %63, %67, %70, %74, %78, %82, %86 in 0 : vector<4x256xf32>, vector<4x256xf32>, vector<4x256xf32>, vector<4x256xf32>, vector<4x256xf32>, vector<4x256xf32>, vector<4x256xf32>, vector<4x256xf32>, vector<4x256xf32> -> vector<36x256xf32>
    %cst_24 = arith.constant dense<0.000000e+00> : vector<4x256xf32>
    %88 = tpu.matmul %49, %87, %cst_24 {dimension_numbers = #tpu.dot_dimension_numbers<[1], [0], [0], [1], [0, 0, 1, 1], [], []>} : vector<4x36xf32>, vector<36x256xf32>, vector<4x256xf32> -> vector<4x256xf32>
    %89 = vector.broadcast %51 : vector<4x1xf32> to vector<4x256xf32>
    %90 = arith.addf %88, %89 : vector<4x256xf32>
    %cst_25 = arith.constant 0.000000e+00 : f32
    %91 = vector.broadcast %cst_25 : f32 to vector<4x256xf32>
    %92 = arith.maximumf %90, %91 : vector<4x256xf32>
    %c0_26 = arith.constant 0 : index
    %c0_27 = arith.constant 0 : index
    %c0_28 = arith.constant 0 : index
    %93 = vector.load %arg5[%c0_26, %c0_27, %c0_28] : memref<1x4x256xf32, #tpu.memory_space<vmem>>, vector<1x4x256xf32>
    %94 = vector.shape_cast %93 : vector<1x4x256xf32> to vector<4x256xf32>
    %95 = vector.shape_cast %92 : vector<4x256xf32> to vector<1x4x256xf32>
    tpu.vector_store %arg5[%c0_26, %c0_27, %c0_28], %95 {strides = array<i32>} : memref<1x4x256xf32, #tpu.memory_space<vmem>>, vector<1x4x256xf32>,
    return
  }
  func.func @transform_0(%arg0: i32) -> (i32, i32, i32) {
    %c0_i32 = arith.constant 0 : i32
    %c0_i32_0 = arith.constant 0 : i32
    %c0_i32_1 = arith.constant 0 : i32
    return %arg0, %c0_i32, %c0_i32_0 : i32, i32, i32
  }
  func.func @transform_1(%arg0: i32) -> (i32, i32, i32) {
    %c0_i32 = arith.constant 0 : i32
    %c0_i32_0 = arith.constant 0 : i32
    %c0_i32_1 = arith.constant 0 : i32
    %c0_i32_2 = arith.constant 0 : i32
    return %c0_i32, %c0_i32_0, %c0_i32_1 : i32, i32, i32
  }
  func.func @transform_2(%arg0: i32) -> (i32, i32, i32) {
    %c0_i32 = arith.constant 0 : i32
    %c0_i32_0 = arith.constant 0 : i32
    %c0_i32_1 = arith.constant 0 : i32
    %c0_i32_2 = arith.constant 0 : i32
    return %c0_i32, %c0_i32_0, %c0_i32_1 : i32, i32, i32
  }
  func.func @transform_3(%arg0: i32) -> (i32, i32) {
    %c0_i32 = arith.constant 0 : i32
    %c0_i32_0 = arith.constant 0 : i32
    %c0_i32_1 = arith.constant 0 : i32
    return %c0_i32, %c0_i32_0 : i32, i32
  }
  func.func @transform_4(%arg0: i32) -> (i32, i32, i32) {
    %c0_i32 = arith.constant 0 : i32
    %c0_i32_0 = arith.constant 0 : i32
    %c0_i32_1 = arith.constant 0 : i32
    return %arg0, %c0_i32, %c0_i32_0 : i32, i32, i32
  }
}

</mosaic_0001>

<llo_original>
// kernel: block_forward.1
$region0: #{block_forward.1}
  #allocation0 [shape = 'u32[]', space=smem, size = 0x4, offset = 0x4, fixed_abs, tag = 'smem constant byte address 0x4 - core index']
  #allocation1 [shape = 'u32[144,128]{1,0:T(1,128)}', space=vmem, size = 0x12000, scoped, tag = 'internal scratch']
  %s0 = inlined_call_operand.vmem [shape: f32[2,4,256], index: 0, kind: input, shape index: {}]
  %s1 = inlined_call_operand.vmem [shape: f32[2,4,36], index: 1, kind: input, shape index: {}]
  %s2 = inlined_call_operand.vmem [shape: f32[2,4,1], index: 2, kind: input, shape index: {}]
  %s3 = inlined_call_operand.vmem [shape: f32[9,256], index: 3, kind: input, shape index: {}]
  %s4 = inlined_call_operand.vmem [shape: f32[2,4,256], index: 4, kind: output, shape index: {}]
  %s5 = sld [smem:[#allocation0]]
  $region49: #{block_forward.1} parent=0
    _
  %s7 = ssub.s32 1, %s5
  %s8 = scalar_select 0, %s7, %s5
  loop: start=0, step=1, limit=4
  $region2: #{block_forward.1} parent=0 // loop_pre_header
    _
  $region3: #{block_forward.1} parent=0 // loop_header
    %s10 = sphi 0, %s14
    %p11 = scmp.ge.s32.totalorder %s10, 4
    %s20 = sphi 0, %s22
    %s23 = sphi 0, %s20
    %s24 = sphi 0, %s23
    %s40 = sphi 0, %s24
    %s44 = sphi 0, %s44
    %s46 = sphi 0, %s44
    %s47 = sphi 0, %s46
    %s61 = sphi 0, %s47
    %s65 = sphi 0, %s65
    %s67 = sphi 0, %s65
    %s68 = sphi 0, %s67
    %s82 = sphi 0, %s68
    %s86 = sphi 0, %s86
    %s88 = sphi 0, %s86
    %s89 = sphi 0, %s88
    %s103 = sphi 0, %s89
    %s109 = sphi 0, %s111
    %s112 = sphi 0, %s109
    %s113 = sphi 0, %s112
    %s129 = sphi 0, %s113
  $region4: #{block_forward.1} parent=0 // loop_header_branch
    %13 = sbr.rel (%p11) target = $region8
  $region5: #{block_forward.1} parent=0 // loop_body
    %s15 = ssub.s32 %s10, 1
    %s16 = ssub.s32 %s10, 2
    %s17 = sadd.s32 %s10, 1
    %s18 = ssub.s32 %s10, %s17
    %p19 = scmp.eq.s32.totalorder %s18, 0
    %s21 = sadd.s32 %s20, 1
    %s22 = scalar_select %p19, %s20, %s21
    %p25 = pneg %p19
    %p26 = scmp.eq.s32.totalorder %s10, 1
    %p27 = por %p25, %p26
    %p28 = scmp.ne.s32.totalorder %s20, %s23
    %p29 = scmp.eq.s32.totalorder %s10, 0
    %p30 = por %p28, %p29
    %p31 = scmp.ne.s32.totalorder %s20, %s23
    %p32 = scmp.eq.s32.totalorder %s15, 1
    %p33 = por %p31, %p32
    %p34 = scmp.ne.s32.totalorder %s23, %s24
    %p35 = scmp.eq.s32.totalorder %s15, 0
    %p36 = por %p34, %p35
    %p37 = scmp.ne.s32.totalorder %s23, %s24
    %p38 = scmp.eq.s32.totalorder %s16, 1
    %p39 = por %p37, %p38
    %p41 = scmp.ne.s32.totalorder %s24, %s40
    %p42 = scmp.eq.s32.totalorder %s16, 0
    %p43 = por %p41, %p42
    %s45 = sadd.s32 %s44, 1
    %p48 = scmp.eq.s32.totalorder %s10, 1
    %p49 = scmp.ne.s32.totalorder %s44, %s46
    %p50 = scmp.eq.s32.totalorder %s10, 0
    %p51 = por %p49, %p50
    %p52 = scmp.ne.s32.totalorder %s44, %s46
    %p53 = scmp.eq.s32.totalorder %s15, 1
    %p54 = por %p52, %p53
    %p55 = scmp.ne.s32.totalorder %s46, %s47
    %p56 = scmp.eq.s32.totalorder %s15, 0
    %p57 = por %p55, %p56
    %p58 = scmp.ne.s32.totalorder %s46, %s47
    %p59 = scmp.eq.s32.totalorder %s16, 1
    %p60 = por %p58, %p59
    %p62 = scmp.ne.s32.totalorder %s47, %s61
    %p63 = scmp.eq.s32.totalorder %s16, 0
    %p64 = por %p62, %p63
    %s66 = sadd.s32 %s65, 1
    %p69 = scmp.eq.s32.totalorder %s10, 1
    %p70 = scmp.ne.s32.totalorder %s65, %s67
    %p71 = scmp.eq.s32.totalorder %s10, 0
    %p72 = por %p70, %p71
    %p73 = scmp.ne.s32.totalorder %s65, %s67
    %p74 = scmp.eq.s32.totalorder %s15, 1
    %p75 = por %p73, %p74
    %p76 = scmp.ne.s32.totalorder %s67, %s68
    %p77 = scmp.eq.s32.totalorder %s15, 0
    %p78 = por %p76, %p77
    %p79 = scmp.ne.s32.totalorder %s67, %s68
    %p80 = scmp.eq.s32.totalorder %s16, 1
    %p81 = por %p79, %p80
    %p83 = scmp.ne.s32.totalorder %s68, %s82
    %p84 = scmp.eq.s32.totalorder %s16, 0
    %p85 = por %p83, %p84
    %s87 = sadd.s32 %s86, 1
    %p90 = scmp.eq.s32.totalorder %s10, 1
    %p91 = scmp.ne.s32.totalorder %s86, %s88
    %p92 = scmp.eq.s32.totalorder %s10, 0
    %p93 = por %p91, %p92
    %p94 = scmp.ne.s32.totalorder %s86, %s88
    %p95 = scmp.eq.s32.totalorder %s15, 1
    %p96 = por %p94, %p95
    %p97 = scmp.ne.s32.totalorder %s88, %s89
    %p98 = scmp.eq.s32.totalorder %s15, 0
    %p99 = por %p97, %p98
    %p100 = scmp.ne.s32.totalorder %s88, %s89
    %p101 = scmp.eq.s32.totalorder %s16, 1
    %p102 = por %p100, %p101
    %p104 = scmp.ne.s32.totalorder %s89, %s103
    %p105 = scmp.eq.s32.totalorder %s16, 0
    %p106 = por %p104, %p105
    %s107 = ssub.s32 %s10, %s17
    %p108 = scmp.eq.s32.totalorder %s107, 0
    %s110 = sadd.s32 %s109, 1
    %s111 = scalar_select %p108, %s109, %s110
    %p114 = pneg %p108
    %p115 = scmp.eq.s32.totalorder %s10, 1
    %p116 = por %p114, %p115
    %p117 = scmp.ne.s32.totalorder %s109, %s112
    %p118 = scmp.eq.s32.totalorder %s10, 0
    %p119 = por %p117, %p118
    %p120 = scmp.ne.s32.totalorder %s109, %s112
    %p121 = scmp.eq.s32.totalorder %s15, 1
    %p122 = por %p120, %p121
    %p123 = scmp.ne.s32.totalorder %s112, %s113
    %p124 = scmp.eq.s32.totalorder %s15, 0
    %p125 = por %p123, %p124
    %p126 = scmp.ne.s32.totalorder %s112, %s113
    %p127 = scmp.eq.s32.totalorder %s16, 1
    %p128 = por %p126, %p127
    %p130 = scmp.ne.s32.totalorder %s113, %s129
    %p131 = scmp.eq.s32.totalorder %s16, 0
    %p132 = por %p130, %p131
    %p133 = scmp.le.s32.totalorder 1, %s10
    %p134 = scmp.lt.s32.totalorder %s10, 3
    %p135 = pnand %p133, %p134
    %p136 = pneg %p135
    // Predicated region
    $region9: #{block_forward.1} parent=5 // pred_check
      _
    $region10: #{block_forward.1} parent=5 // pred_check_branch
      %138 = sbr.rel (%p135) target = $region12
    $region11: #{block_forward.1} parent=5 // pred_region
      %s139 = ssub.s32 %s10, 1
      // Predicated region
      $region13: #{block_forward.1} parent=11 // pred_check
        %p140 = pneg %p57
      $region14: #{block_forward.1} parent=11 // pred_check_branch
        %142 = sbr.rel (%p140) target = $region16
      $region15: #{block_forward.1} parent=11 // pred_region
        _
      $region16: #{block_forward.1} parent=11 // pred_fallthru
        _
      // Predicated region
      $region17: #{block_forward.1} parent=11 // pred_check
        %p143 = pneg %p78
      $region18: #{block_forward.1} parent=11 // pred_check_branch
        %145 = sbr.rel (%p143) target = $region20
      $region19: #{block_forward.1} parent=11 // pred_region
        _
      $region20: #{block_forward.1} parent=11 // pred_fallthru
        _
      // Predicated region
      $region21: #{block_forward.1} parent=11 // pred_check
        %p146 = pneg %p99
      $region22: #{block_forward.1} parent=11 // pred_check_branch
        %148 = sbr.rel (%p146) target = $region24
      $region23: #{block_forward.1} parent=11 // pred_region
        _
      $region24: #{block_forward.1} parent=11 // pred_fallthru
        _
    $region12: #{block_forward.1} parent=5 // pred_fallthru
      _
    %p149 = scmp.lt.s32.totalorder %s10, 2
    // Predicated region
    $region25: #{block_forward.1} parent=5 // pred_check
      %p150 = pneg %p149
    $region26: #{block_forward.1} parent=5 // pred_check_branch
      %152 = sbr.rel (%p150) target = $region28
    $region27: #{block_forward.1} parent=5 // pred_region
      // Predicated region
      $region29: #{block_forward.1} parent=27 // pred_check
        %p153 = pneg %p30
      $region30: #{block_forward.1} parent=27 // pred_check_branch
        %155 = sbr.rel (%p153) target = $region32
      $region31: #{block_forward.1} parent=27 // pred_region
        %p156 = scmp.lt.s32.totalorder %s10, 1
        %s157 = scalar_select %p156, %s10, 1
        %s158 = smul.addr %s157, 2
        %s159 = smul.addr %s158, 4
        %s160 = scalar_lea.vmem %s0, %s159
      $region32: #{block_forward.1} parent=27 // pred_fallthru
        _
    $region28: #{block_forward.1} parent=5 // pred_fallthru
      _
    %p161 = scmp.le.s32.totalorder 1, %s10
    %p162 = scmp.lt.s32.totalorder %s10, 3
    %p163 = pnand %p161, %p162
    %p164 = pneg %p163
    // Predicated region
    $region33: #{block_forward.1} parent=5 // pred_check
      _
    $region34: #{block_forward.1} parent=5 // pred_check_branch
      %166 = sbr.rel (%p163) target = $region36
    $region35: #{block_forward.1} parent=5 // pred_region
      %s167 = ssub.s32 %s10, 1
      %p168 = scmp.lt.s32.totalorder %s15, 1
      %s169 = scalar_select %p168, %s15, 1
      %s170 = smul.addr %s169, 2
      %s171 = smul.addr %s170, 4
      %s172 = scalar_lea.vmem %s0, %s171
      %p173 = pneg %p36
      %p174 = pneg %p33
      %p175 = pneg %p57
      %p176 = pneg %p54
      %p177 = pneg %p78
      %p178 = pneg %p75
      %p179 = pneg %p99
      %p180 = pneg %p96
      %p181 = pneg %p125
      %p182 = pneg %p122
      %p183 = scmp.lt.s32.totalorder %s15, 1
      %s184 = scalar_select %p183, %s15, 1
      %s185 = smul.addr %s184, 2
      %s186 = smul.addr %s185, 4
      %s187 = scalar_lea.vmem %s4, %s186
      %p188 = scmp.lt.s32.totalorder %s15, 1
      %s189 = scalar_select %p188, %s15, 1
      %s190 = smul.addr %s189, 2
      %s191 = smul.addr %s190, 4
      %s192 = scalar_lea.vmem %s0, %s191
      %p193 = scmp.lt.s32.totalorder %s15, 1
      %s194 = scalar_select %p193, %s15, 1
      %s195 = smul.addr %s194, 2
      %s196 = smul.addr %s195, 4
      %s197 = scalar_lea.vmem %s4, %s196
      %v198 = vld [vmem:[%s192] sm:$0xff]
      %v199 = vld [vmem:[%s3] sm:$0xff]
      %v200 = vld [vmem:[%s3 + $0x8] sm:$0xff]
      %v201 = vld [vmem:[%s3 + $0x10] sm:$0x1]
      %v202 = vld [vmem:[%s3 + $0x18] sm:$0x1]
      %v203 = vld [vmem:[%s1] sm:$0xf]
      %v204 = vld [vmem:[%s2] sm:$0xf]
      %v206 = vcombine.high %v198, %v198
      %208 = vrot.lane.b32.xlu0 %v198, 17
      %v209 = vpop.permute.xlu0 %208
      %210 = vrot.lane.b32.xlu0 %v206, 17
      %v211 = vpop.permute.xlu0 %210
      %v212 = vlaneseq
      %v213 = vand.u32 %v212, 127
      %vm214 = vcmp.lt.s32.totalorder %v213, 17
      %v215 = vsel %vm214, %v209, %v211
      %v216 = vsel %vm214, %v211, %v209
      %v217 = vlaneseq
      %v218 = vshrl.u32 %v217, 7
      %v219 = vsub.s32 0, %v218
      %v220 = vrot.slane %v199, %v219
      %v221 = vlaneseq
      %v222 = vshrl.u32 %v221, 7
      %v223 = vsub.s32 0, %v222
      %v224 = vrot.slane %v200, %v223
      %v225 = vmul.f32 %v216, %v220
      %v226 = vmul.f32 %v215, %v224
      %227 = vrot.lane.b32.xlu0 %v198, 16
      %v228 = vpop.permute.xlu0 %227
      %229 = vrot.lane.b32.xlu0 %v206, 16
      %v230 = vpop.permute.xlu0 %229
      %vm231 = vcmp.lt.s32.totalorder %v213, 16
      %v232 = vsel %vm231, %v228, %v230
      %v233 = vsel %vm231, %v230, %v228
      %v234 = vlaneseq
      %v235 = vshrl.u32 %v234, 7
      %v236 = vsub.s32 1, %v235
      %v237 = vrot.slane %v199, %v236
      %v238 = vlaneseq
      %v239 = vshrl.u32 %v238, 7
      %v240 = vsub.s32 1, %v239
      %v241 = vrot.slane %v200, %v240
      %v242 = vmul.f32 %v233, %v237
      %v243 = vmul.f32 %v232, %v241
      %244 = vrot.lane.b32.xlu0 %v198, 15
      %v245 = vpop.permute.xlu0 %244
      %246 = vrot.lane.b32.xlu0 %v206, 15
      %v247 = vpop.permute.xlu0 %246
      %vm248 = vcmp.lt.s32.totalorder %v213, 15
      %v249 = vsel %vm248, %v245, %v247
      %v250 = vsel %vm248, %v247, %v245
      %v251 = vlaneseq
      %v252 = vshrl.u32 %v251, 7
      %v253 = vsub.s32 2, %v252
      %v254 = vrot.slane %v199, %v253
      %v255 = vlaneseq
      %v256 = vshrl.u32 %v255, 7
      %v257 = vsub.s32 2, %v256
      %v258 = vrot.slane %v200, %v257
      %v259 = vmul.f32 %v250, %v254
      %v260 = vmul.f32 %v249, %v258
      %261 = vrot.lane.b32.xlu0 %v198, 1
      %v262 = vpop.permute.xlu0 %261
      %263 = vrot.lane.b32.xlu0 %v206, 1
      %v264 = vpop.permute.xlu0 %263
      %vm265 = vcmp.lt.s32.totalorder %v213, 1
      %v266 = vsel %vm265, %v262, %v264
      %v267 = vsel %vm265, %v264, %v262
      %v268 = vlaneseq
      %v269 = vshrl.u32 %v268, 7
      %v270 = vsub.s32 3, %v269
      %v271 = vrot.slane %v199, %v270
      %v272 = vlaneseq
      %v273 = vshrl.u32 %v272, 7
      %v274 = vsub.s32 3, %v273
      %v275 = vrot.slane %v200, %v274
      %v276 = vmul.f32 %v267, %v271
      %v277 = vmul.f32 %v266, %v275
      %v278 = vlaneseq
      %v279 = vshrl.u32 %v278, 7
      %v280 = vsub.s32 4, %v279
      %v281 = vrot.slane %v199, %v280
      %v282 = vlaneseq
      %v283 = vshrl.u32 %v282, 7
      %v284 = vsub.s32 4, %v283
      %v285 = vrot.slane %v200, %v284
      %v288 = vcombine.low %v281, %v285
      %v290 = vmul.f32 %v198, %v288
      %291 = vrot.lane.b32.xlu0 %v198, 127
      %v292 = vpop.permute.xlu0 %291
      %293 = vrot.lane.b32.xlu0 %v206, 127
      %v294 = vpop.permute.xlu0 %293
      %vm295 = vcmp.lt.s32.totalorder %v213, 127
      %v296 = vsel %vm295, %v292, %v294
      %v297 = vsel %vm295, %v294, %v292
      %v298 = vlaneseq
      %v299 = vshrl.u32 %v298, 7
      %v300 = vsub.s32 5, %v299
      %v301 = vrot.slane %v199, %v300
      %v302 = vlaneseq
      %v303 = vshrl.u32 %v302, 7
      %v304 = vsub.s32 5, %v303
      %v305 = vrot.slane %v200, %v304
      %v306 = vmul.f32 %v296, %v301
      %v307 = vmul.f32 %v297, %v305
      %308 = vrot.lane.b32.xlu0 %v198, 113
      %v309 = vpop.permute.xlu0 %308
      %310 = vrot.lane.b32.xlu0 %v206, 113
      %v311 = vpop.permute.xlu0 %310
      %vm312 = vcmp.lt.s32.totalorder %v213, 113
      %v313 = vsel %vm312, %v309, %v311
      %v314 = vsel %vm312, %v311, %v309
      %v315 = vlaneseq
      %v316 = vshrl.u32 %v315, 7
      %v317 = vsub.s32 6, %v316
      %v318 = vrot.slane %v199, %v317
      %v319 = vlaneseq
      %v320 = vshrl.u32 %v319, 7
      %v321 = vsub.s32 6, %v320
      %v322 = vrot.slane %v200, %v321
      %v323 = vmul.f32 %v313, %v318
      %v324 = vmul.f32 %v314, %v322
      %325 = vrot.lane.b32.xlu0 %v198, 112
      %v326 = vpop.permute.xlu0 %325
      %327 = vrot.lane.b32.xlu0 %v206, 112
      %v328 = vpop.permute.xlu0 %327
      %vm329 = vcmp.lt.s32.totalorder %v213, 112
      %v330 = vsel %vm329, %v326, %v328
      %v331 = vsel %vm329, %v328, %v326
      %v332 = vlaneseq
      %v333 = vshrl.u32 %v332, 7
      %v334 = vsub.s32 7, %v333
      %v335 = vrot.slane %v199, %v334
      %v336 = vlaneseq
      %v337 = vshrl.u32 %v336, 7
      %v338 = vsub.s32 7, %v337
      %v339 = vrot.slane %v200, %v338
      %v340 = vmul.f32 %v330, %v335
      %v341 = vmul.f32 %v331, %v339
      %342 = vrot.lane.b32.xlu0 %v198, 111
      %v343 = vpop.permute.xlu0 %342
      %344 = vrot.lane.b32.xlu0 %v206, 111
      %v345 = vpop.permute.xlu0 %344
      %vm346 = vcmp.lt.s32.totalorder %v213, 111
      %v347 = vsel %vm346, %v343, %v345
      %v348 = vsel %vm346, %v345, %v343
      %v349 = vlaneseq
      %v350 = vshrl.u32 %v349, 7
      %v351 = vsub.s32 0, %v350
      %v352 = vrot.slane %v201, %v351
      %v353 = vlaneseq
      %v354 = vshrl.u32 %v353, 7
      %v355 = vsub.s32 0, %v354
      %v356 = vrot.slane %v202, %v355
      %v357 = vmul.f32 %v347, %v352
      %v358 = vmul.f32 %v348, %v356
      %v361 = vrot.slane %v242, 4
      %v362 = vrot.slane %v243, 4
      %v367 = vrot.slane %v276, 4
      %v368 = vrot.slane %v277, 4
      %v372 = vcombine.high %v290, %v290
      %v376 = vrot.slane %v306, 4
      %v377 = vrot.slane %v307, 4
      %v382 = vrot.slane %v340, 4
      %v383 = vrot.slane %v341, 4
      %vm386 = vcmask 1043456
      %v387 = vsel %vm386, %v225, %v361
      %v388 = vsel %vm386, %v226, %v362
      %v389 = vsel %vm386, %v259, %v367
      %v390 = vsel %vm386, %v260, %v368
      %v391 = vsel %vm386, %v290, %v376
      %v392 = vsel %vm386, %v372, %v377
      %v393 = vsel %vm386, %v323, %v382
      %v394 = vsel %vm386, %v324, %v383
      %396 = vset.pattern.permute.xlu0 0
      %397 = vperm.xlu0 %396, %v204
      %v398 = vpop.permute.xlu0 %397
      %vm400 = vcmask 293888
      %v402 = vsel %vm400, %v203, 0
      %v405 = vsel %vm386, %v357, 0
      %v408 = vsel %vm386, %v358, 0
      %410 = vmatprep.subr.mxu0 %v388
      %411 = vmatpush1.msra.mxu0 %v387
      %412 = vmatprep.subr.mxu0 %v390
      %413 = vmatpush1.msra.mxu0 %v389
      %414 = vmatprep.subr.mxu0 %v392
      %415 = vmatpush1.msra.mxu0 %v391
      %416 = vmatprep.subr.mxu0 %v394
      %417 = vmatpush1.msra.mxu0 %v393
      %418 = vmatprep.subr.mxu0 %v408
      %419 = vmatpush1.msra.mxu0 %v405
      %420 = vmatprep.subr.mxu0 0.0
      %421 = vmatpush1.msra.mxu0 0.0
      %422 = vmatprep.subr.mxu0 0.0
      %423 = vmatpush1.msra.mxu0 0.0
      %424 = vmatprep.subr.mxu0 0.0
      %425 = vmatpush1.msra.mxu0 0.0
      %426 = vmatprep.subr.mxu0 0.0
      %427 = vmatpush1.msra.mxu0 0.0
      %428 = vmatprep.subr.mxu0 0.0
      %429 = vmatpush1.msra.mxu0 0.0
      %430 = vmatprep.subr.mxu0 0.0
      %431 = vmatpush1.msra.mxu0 0.0
      %432 = vmatprep.subr.mxu0 0.0
      %433 = vmatpush1.msra.mxu0 0.0
      %434 = vmatprep.subr.mxu0 0.0
      %435 = vmatpush1.msra.mxu0 0.0
      %436 = vmatprep.subr.mxu0 0.0
      %437 = vmatpush1.msra.mxu0 0.0
      %438 = vmatprep.subr.mxu0 0.0
      %439 = vmatpush1.msra.mxu0 0.0
      %440 = vmatprep.subr.mxu0 0.0
      %441 = vmatpush1.msra.mxu0 0.0
      %442 = vmatprep.subr.mxu0 0.0
      %443 = vmatpush1.msra.mxu0 0.0
      %444 = vmatprep.subr.mxu0 0.0
      %445 = vmatpush1.msra.mxu0 0.0
      %446 = vmatprep.subr.mxu0 0.0
      %447 = vmatpush1.msra.mxu0 0.0
      %448 = vmatprep.subr.mxu0 0.0
      %449 = vmatpush1.msra.mxu0 0.0
      %450 = vmatprep.subr.mxu0 0.0
      %451 = vmatpush1.msra.mxu0 0.0
      %452 = vmatprep.subr.mxu0 0.0
      %453 = vmatpush1.msra.mxu0 0.0
      %454 = vmatprep.subr.mxu0 0.0
      %455 = vmatpush1.msra.mxu0 0.0
      %456 = vmatprep.subr.mxu0 0.0
      %457 = vmatpush1.msra.mxu0 0.0
      %458 = vmatprep.subr.mxu0 0.0
      %459 = vmatpush1.msra.mxu0 0.0
      %460 = vmatprep.subr.mxu0 0.0
      %461 = vmatpush1.msra.mxu0 0.0
      %462 = vmatprep.subr.mxu0 0.0
      %463 = vmatpush1.msra.mxu0 0.0
      %464 = vmatprep.subr.mxu0 0.0
      %465 = vmatpush1.msra.mxu0 0.0
      %466 = vmatprep.subr.mxu0 0.0
      %467 = vmatpush1.msra.mxu0 0.0
      %468 = vmatprep.subr.mxu0 0.0
      %469 = vmatpush1.msra.mxu0 0.0
      %470 = vmatprep.subr.mxu0 0.0
      %471 = vmatpush1.msra.mxu0 0.0
      %472 = vmatprep.subr.mxu0 0.0
      %473 = vmatpush1.msra.mxu0 0.0
      %474 = vmatprep.mubr.f32.mxu0 0.0
      %475 = vmatmul.mubr.f32.gmra.mrb[0].mxu0 %v402
      %v476 = vpop.f32.mrb[0].mxu0
      %v477 = vadd.f32 %v398, %v476
      %v478 = vpop.f32.mrb[0].mxu0
      %v479 = vadd.f32 %v398, %v478
      %480 = vdwg.mxu0
      %v481 = vmax.f32 %v477, 0.0
      %v482 = vmax.f32 %v479, 0.0
      %s483 = scalar_lea.vmem %s1, 4
      %v484 = vld [vmem:[%s483] sm:$0xf]
      %s485 = scalar_lea.vmem %s2, 4
      %v486 = vld [vmem:[%s485] sm:$0xf]
      %487 = vrot.lane.b32.xlu0 %v481, 17
      %v488 = vpop.permute.xlu0 %487
      %489 = vrot.lane.b32.xlu0 %v482, 17
      %v490 = vpop.permute.xlu0 %489
      %v491 = vsel %vm214, %v488, %v490
      %v492 = vsel %vm214, %v490, %v488
      %v493 = vmul.f32 %v492, %v220
      %v494 = vmul.f32 %v491, %v224
      %495 = vrot.lane.b32.xlu0 %v481, 16
      %v496 = vpop.permute.xlu0 %495
      %497 = vrot.lane.b32.xlu0 %v482, 16
      %v498 = vpop.permute.xlu0 %497
      %v499 = vsel %vm231, %v496, %v498
      %v500 = vsel %vm231, %v498, %v496
      %v501 = vmul.f32 %v500, %v237
      %v502 = vmul.f32 %v499, %v241
      %503 = vrot.lane.b32.xlu0 %v481, 15
      %v504 = vpop.permute.xlu0 %503
      %505 = vrot.lane.b32.xlu0 %v482, 15
      %v506 = vpop.permute.xlu0 %505
      %v507 = vsel %vm248, %v504, %v506
      %v508 = vsel %vm248, %v506, %v504
      %v509 = vmul.f32 %v508, %v254
      %v510 = vmul.f32 %v507, %v258
      %511 = vrot.lane.b32.xlu0 %v481, 1
      %v512 = vpop.permute.xlu0 %511
      %513 = vrot.lane.b32.xlu0 %v482, 1
      %v514 = vpop.permute.xlu0 %513
      %v515 = vsel %vm265, %v512, %v514
      %v516 = vsel %vm265, %v514, %v512
      %v517 = vmul.f32 %v516, %v271
      %v518 = vmul.f32 %v515, %v275
      %v519 = vmul.f32 %v481, %v281
      %v520 = vmul.f32 %v482, %v285
      %521 = vrot.lane.b32.xlu0 %v481, 127
      %v522 = vpop.permute.xlu0 %521
      %523 = vrot.lane.b32.xlu0 %v482, 127
      %v524 = vpop.permute.xlu0 %523
      %v525 = vsel %vm295, %v522, %v524
      %v526 = vsel %vm295, %v524, %v522
      %v527 = vmul.f32 %v525, %v301
      %v528 = vmul.f32 %v526, %v305
      %529 = vrot.lane.b32.xlu0 %v481, 113
      %v530 = vpop.permute.xlu0 %529
      %531 = vrot.lane.b32.xlu0 %v482, 113
      %v532 = vpop.permute.xlu0 %531
      %v533 = vsel %vm312, %v530, %v532
      %v534 = vsel %vm312, %v532, %v530
      %v535 = vmul.f32 %v533, %v318
      %v536 = vmul.f32 %v534, %v322
      %537 = vrot.lane.b32.xlu0 %v481, 112
      %v538 = vpop.permute.xlu0 %537
      %539 = vrot.lane.b32.xlu0 %v482, 112
      %v540 = vpop.permute.xlu0 %539
      %v541 = vsel %vm329, %v538, %v540
      %v542 = vsel %vm329, %v540, %v538
      %v543 = vmul.f32 %v541, %v335
      %v544 = vmul.f32 %v542, %v339
      %545 = vrot.lane.b32.xlu0 %v481, 111
      %v546 = vpop.permute.xlu0 %545
      %547 = vrot.lane.b32.xlu0 %v482, 111
      %v548 = vpop.permute.xlu0 %547
      %v549 = vsel %vm346, %v546, %v548
      %v550 = vsel %vm346, %v548, %v546
      %v551 = vmul.f32 %v549, %v352
      %v552 = vmul.f32 %v550, %v356
      %v555 = vrot.slane %v501, 4
      %v556 = vrot.slane %v502, 4
      %v561 = vrot.slane %v517, 4
      %v562 = vrot.slane %v518, 4
      %v567 = vrot.slane %v527, 4
      %v568 = vrot.slane %v528, 4
      %v573 = vrot.slane %v543, 4
      %v574 = vrot.slane %v544, 4
      %v577 = vsel %vm386, %v493, %v555
      %v578 = vsel %vm386, %v494, %v556
      %v579 = vsel %vm386, %v509, %v561
      %v580 = vsel %vm386, %v510, %v562
      %v581 = vsel %vm386, %v519, %v567
      %v582 = vsel %vm386, %v520, %v568
      %v583 = vsel %vm386, %v535, %v573
      %v584 = vsel %vm386, %v536, %v574
      %586 = vset.pattern.permute.xlu0 0
      %587 = vperm.xlu0 %586, %v486
      %v588 = vpop.permute.xlu0 %587
      %v591 = vsel %vm400, %v484, 0
      %v594 = vsel %vm386, %v551, 0
      %v597 = vsel %vm386, %v552, 0
      %599 = vmatprep.subr.mxu0 %v578
      %600 = vmatpush1.msra.mxu0 %v577
      %601 = vmatprep.subr.mxu0 %v580
      %602 = vmatpush1.msra.mxu0 %v579
      %603 = vmatprep.subr.mxu0 %v582
      %604 = vmatpush1.msra.mxu0 %v581
      %605 = vmatprep.subr.mxu0 %v584
      %606 = vmatpush1.msra.mxu0 %v583
      %607 = vmatprep.subr.mxu0 %v597
      %608 = vmatpush1.msra.mxu0 %v594
      %609 = vmatprep.subr.mxu0 0.0
      %610 = vmatpush1.msra.mxu0 0.0
      %611 = vmatprep.subr.mxu0 0.0
      %612 = vmatpush1.msra.mxu0 0.0
      %613 = vmatprep.subr.mxu0 0.0
      %614 = vmatpush1.msra.mxu0 0.0
      %615 = vmatprep.subr.mxu0 0.0
      %616 = vmatpush1.msra.mxu0 0.0
      %617 = vmatprep.subr.mxu0 0.0
      %618 = vmatpush1.msra.mxu0 0.0
      %619 = vmatprep.subr.mxu0 0.0
      %620 = vmatpush1.msra.mxu0 0.0
      %621 = vmatprep.subr.mxu0 0.0
      %622 = vmatpush1.msra.mxu0 0.0
      %623 = vmatprep.subr.mxu0 0.0
      %624 = vmatpush1.msra.mxu0 0.0
      %625 = vmatprep.subr.mxu0 0.0
      %626 = vmatpush1.msra.mxu0 0.0
      %627 = vmatprep.subr.mxu0 0.0
      %628 = vmatpush1.msra.mxu0 0.0
      %629 = vmatprep.subr.mxu0 0.0
      %630 = vmatpush1.msra.mxu0 0.0
      %631 = vmatprep.subr.mxu0 0.0
      %632 = vmatpush1.msra.mxu0 0.0
      %633 = vmatprep.subr.mxu0 0.0
      %634 = vmatpush1.msra.mxu0 0.0
      %635 = vmatprep.subr.mxu0 0.0
      %636 = vmatpush1.msra.mxu0 0.0
      %637 = vmatprep.subr.mxu0 0.0
      %638 = vmatpush1.msra.mxu0 0.0
      %639 = vmatprep.subr.mxu0 0.0
      %640 = vmatpush1.msra.mxu0 0.0
      %641 = vmatprep.subr.mxu0 0.0
      %642 = vmatpush1.msra.mxu0 0.0
      %643 = vmatprep.subr.mxu0 0.0
      %644 = vmatpush1.msra.mxu0 0.0
      %645 = vmatprep.subr.mxu0 0.0
      %646 = vmatpush1.msra.mxu0 0.0
      %647 = vmatprep.subr.mxu0 0.0
      %648 = vmatpush1.msra.mxu0 0.0
      %649 = vmatprep.subr.mxu0 0.0
      %650 = vmatpush1.msra.mxu0 0.0
      %651 = vmatprep.subr.mxu0 0.0
      %652 = vmatpush1.msra.mxu0 0.0
      %653 = vmatprep.subr.mxu0 0.0
      %654 = vmatpush1.msra.mxu0 0.0
      %655 = vmatprep.subr.mxu0 0.0
      %656 = vmatpush1.msra.mxu0 0.0
      %657 = vmatprep.subr.mxu0 0.0
      %658 = vmatpush1.msra.mxu0 0.0
      %659 = vmatprep.subr.mxu0 0.0
      %660 = vmatpush1.msra.mxu0 0.0
      %661 = vmatprep.subr.mxu0 0.0
      %662 = vmatpush1.msra.mxu0 0.0
      %663 = vmatprep.mubr.f32.mxu0 0.0
      %664 = vmatmul.mubr.f32.gmra.mrb[0].mxu0 %v591
      %v665 = vpop.f32.mrb[0].mxu0
      %v666 = vadd.f32 %v588, %v665
      %v667 = vpop.f32.mrb[0].mxu0
      %v668 = vadd.f32 %v588, %v667
      %669 = vdwg.mxu0
      %v670 = vmax.f32 %v666, 0.0
      %v671 = vmax.f32 %v668, 0.0
      %v674 = vcombine.low %v670, %v671
      %676 = vst [vmem:[%s197] sm:$0xff] %v674
      %p677 = scmp.lt.s32.totalorder %s15, 1
      %s678 = scalar_select %p677, %s15, 1
      %s679 = smul.addr %s678, 2
      %s680 = smul.addr %s679, 4
      %s681 = scalar_lea.vmem %s4, %s680
      // Predicated region
      $region37: #{block_forward.1} parent=35 // pred_check
        %p682 = pneg %p122
      $region38: #{block_forward.1} parent=35 // pred_check_branch
        %684 = sbr.rel (%p682) target = $region40
      $region39: #{block_forward.1} parent=35 // pred_region
        _
      $region40: #{block_forward.1} parent=35 // pred_fallthru
        _
    $region36: #{block_forward.1} parent=5 // pred_fallthru
      _
    %p685 = scmp.le.s32.totalorder 2, %s10
    // Predicated region
    $region41: #{block_forward.1} parent=5 // pred_check
      %p686 = pneg %p685
    $region42: #{block_forward.1} parent=5 // pred_check_branch
      %688 = sbr.rel (%p686) target = $region44
    $region43: #{block_forward.1} parent=5 // pred_region
      %s689 = ssub.s32 %s10, 2
      // Predicated region
      $region45: #{block_forward.1} parent=43 // pred_check
        %p690 = pneg %p128
      $region46: #{block_forward.1} parent=43 // pred_check_branch
        %692 = sbr.rel (%p690) target = $region48
      $region47: #{block_forward.1} parent=43 // pred_region
        %p693 = scmp.lt.s32.totalorder %s16, 1
        %s694 = scalar_select %p693, %s16, 1
        %s695 = smul.addr %s694, 2
        %s696 = smul.addr %s695, 4
        %s697 = scalar_lea.vmem %s4, %s696
      $region48: #{block_forward.1} parent=43 // pred_fallthru
        _
    $region44: #{block_forward.1} parent=5 // pred_fallthru
      _
  $region6: #{block_forward.1} parent=0 // loop_footer
    %s14 = sadd.s32 1, %s10
  $region7: #{block_forward.1} parent=0 // loop_footer_branch
    %9 = sbr.rel target = $region3
  $region8: #{block_forward.1} parent=0 // loop_exit
    _

</llo_original>
